<compile_context>
chip_gen: v7x
topology: tpu7x:2x2x1
jax: 0.10.0
libtpu: 0.0.40
codegen_flags: <defaults>
</compile_context>

<pallas_src>
import functools
import math

import jax
import jax.numpy as jnp
from jax import lax
from jax.experimental import pallas as pl
from jax.experimental.pallas import tpu as pltpu

D_MODEL = 32
MAX_LEN = 1800
DROPOUT_P = 0.1


def make_pe_table(d_model: int = D_MODEL, max_len: int = MAX_LEN) -> jnp.ndarray:
    """Deterministic positional-encoding buffer, identical to the PyTorch __init__."""
    position = jnp.arange(max_len, dtype=jnp.float32)[:, None]              # (max_len, 1)
    div_term = jnp.exp(
        jnp.arange(0, d_model, 2, dtype=jnp.float32) * (-math.log(10000.0) / d_model)
    )                                                                        # (d_model//2,)
    angles = position * div_term                                             # (max_len, d_model//2)
    pe = jnp.zeros((max_len, 1, d_model), dtype=jnp.float32)
    pe = pe.at[:, 0, 0::2].set(jnp.sin(angles))
    pe = pe.at[:, 0, 1::2].set(jnp.cos(angles))
    return pe


def _pe_add_dropout_kernel(seed_ref, x_ref, pe_ref, o_ref, *, batch, keep_prob, threshold):
    """(x + pe) then inverted dropout, on a lane-dense (tile_s, B*D) block."""
    tile_s, bd = x_ref.shape

    # Replicate the (tile_s, D) positional block across batch in-register
    # (XLU/VPU have slack in this memory-bound kernel; pe HBM traffic stays S*D).
    pe = jnp.tile(pe_ref[...], (1, batch))                                   # (tile_s, B*D)
    y = x_ref[...] + pe

    # Counter-based hash PRNG: uniform u32 per global element, keyed on seed.
    # Grid-invariant: depends only on the global (row, col) index, so tiles
    # never replay the same mask.
    row0 = pl.program_id(0) * tile_s
    rows = lax.broadcasted_iota(jnp.int32, (tile_s, bd), 0) + row0
    cols = lax.broadcasted_iota(jnp.int32, (tile_s, bd), 1)
    idx = (rows * bd + cols).astype(jnp.uint32)
    seed = seed_ref[0].astype(jnp.uint32)

    h = idx + seed * jnp.uint32(0x9E3779B9)
    h = h ^ (h >> 16)
    h = h * jnp.uint32(0x7FEB352D)
    h = h ^ (h >> 15)
    h = h * jnp.uint32(0x846CA68B)
    h = h ^ (h >> 16)

    keep = h < jnp.uint32(threshold)
    scale = jnp.float32(1.0 / keep_prob)
    o_ref[...] = jnp.where(keep, y * scale, 0.0).astype(o_ref.dtype)


def positional_encoding_forward(x, pe_full, *, seed: int = 0,
                                dropout_p: float = DROPOUT_P,
                                training: bool = True,
                                tile_s: int | None = None):
    """Pallas forward of PositionalEncoding.

    x:       (seq_len, batch, d_model)
    pe_full: (max_len, 1, d_model)
    """
    S, B, D = x.shape

    if (not training) or dropout_p <= 0.0:
        # Eval mode / p==0: dropout is identity. A plain broadcast-add is
        # already HBM-roofline in XLA and fuses with neighbours, so skip Pallas.
        return x + pe_full[:S]

    BD = B * D
    x2d = x.reshape(S, BD)                                    # free, contiguous reshape
    pe2d = pe_full[:S, 0, :]                                  # (S, D)

    # Sequence-axis tiling: big enough to amortize the ~0.35 us/step overhead,
    # small enough to keep double-buffered tiles well inside v5e/v7x scoped VMEM.
    if tile_s is None:
        tile_s = S if S <= 512 else 512
    tile_s = min(tile_s, S)
    if tile_s < S and tile_s % 8 != 0:
        tile_s = ((tile_s + 7) // 8) * 8                      # (8, 128) sublane rule
    grid_s = pl.cdiv(S, tile_s)

    keep_prob = 1.0 - dropout_p
    threshold = min(int(keep_prob * (2 ** 32)), 2 ** 32 - 1)  # clamp (p==0 handled above)

    seed_arr = jnp.asarray([seed], dtype=jnp.int32)

    kernel = functools.partial(
        _pe_add_dropout_kernel, batch=B, keep_prob=keep_prob, threshold=threshold)

    out2d = pl.pallas_call(
        kernel,
        out_shape=jax.ShapeDtypeStruct((S, BD), x.dtype),
        grid_spec=pltpu.PrefetchScalarGridSpec(
            num_scalar_prefetch=1,                            # dropout seed lives in SMEM
            grid=(grid_s,),
            in_specs=[
                pl.BlockSpec((tile_s, BD), lambda i, seed_ref: (i, 0)),
                pl.BlockSpec((tile_s, D), lambda i, seed_ref: (i, 0)),
            ],
            out_specs=pl.BlockSpec((tile_s, BD), lambda i, seed_ref: (i, 0)),
        ),
        compiler_params=pltpu.CompilerParams(
            dimension_semantics=("parallel",),                # shard grid across TCs (v7x)
        ),
    )(seed_arr, x2d, pe2d)

    return out2d.reshape(S, B, D)


if __name__ == "__main__":
    pe_full = make_pe_table(D_MODEL, MAX_LEN)

    key = jax.random.PRNGKey(0)
    seq_len, batch, d_model = 8, 2, D_MODEL
    x = jax.random.normal(key, (seq_len, batch, d_model), dtype=jnp.float32)

    # Training-mode forward (Pallas: add + inverted dropout).
    y_train = jax.block_until_ready(
        positional_encoding_forward(x, pe_full, seed=0, training=True))
    assert y_train.shape == (seq_len, batch, d_model)

    # Structural check: each element is either dropped (0) or (x + pe) / keep_prob.
    expected = (x + pe_full[:seq_len]) / (1.0 - DROPOUT_P)
    dropped = y_train == 0.0
    matches = jnp.isclose(y_train, expected, atol=1e-5, rtol=1e-5)
    assert bool(jnp.all(dropped | matches)), "training-mode values inconsistent"

    # Eval-mode forward (dropout == identity) vs reference.
    y_eval = jax.block_until_ready(
        positional_encoding_forward(x, pe_full, training=False))
    ref = x + pe_full[:seq_len]
    assert jnp.allclose(y_eval, ref, atol=1e-6), "eval-mode mismatch vs reference"

    # Lane-dense + multi-tile path: B*D = 128 lanes, 3 grid steps, per-tile masks differ.
    x2 = jax.random.normal(jax.random.PRNGKey(1), (24, 4, d_model), dtype=jnp.float32)
    y2 = jax.block_until_ready(
        positional_encoding_forward(x2, pe_full, seed=7, training=True, tile_s=8))
    expected2 = (x2 + pe_full[:24]) / (1.0 - DROPOUT_P)
    ok2 = (y2 == 0.0) | jnp.isclose(y2, expected2, atol=1e-5, rtol=1e-5)
    assert bool(jnp.all(ok2)), "tiled training-mode values inconsistent"

    print("KERNEL_OK")
</pallas_src>

<mosaic_0001>
module attributes {stable_mosaic.version = 11 : i64} {
  func.func @_pe_add_dropout_kernel(%arg0: i32, %arg1: memref<1xi32, #tpu.memory_space<smem>>, %arg2: memref<8x64xf32, #tpu.memory_space<vmem>>, %arg3: memref<8x32xf32, #tpu.memory_space<vmem>>, %arg4: memref<8x64xf32, #tpu.memory_space<vmem>>) attributes {dimension_semantics = [#tpu.dimension_semantics<parallel>], iteration_bounds = array<i64: 1>, scalar_prefetch = 1 : i64, scratch_operands = 0 : i64, tpu.core_type = #tpu.core_type<tc>, window_params = [{transform_indices = @transform_0, window_bounds = array<i64: 8, 64>}, {transform_indices = @transform_1, window_bounds = array<i64: 8, 32>}, {transform_indices = @transform_2, window_bounds = array<i64: 8, 64>}]} {
    %c0 = arith.constant 0 : index
    %c0_0 = arith.constant 0 : index
    %0 = vector.load %arg3[%c0, %c0_0] : memref<8x32xf32, #tpu.memory_space<vmem>>, vector<8x32xf32>
    %1 = tpu.concatenate %0, %0 in 1 : vector<8x32xf32>, vector<8x32xf32> -> vector<8x64xf32>
    %c0_1 = arith.constant 0 : index
    %c0_2 = arith.constant 0 : index
    %2 = vector.load %arg2[%c0_1, %c0_2] : memref<8x64xf32, #tpu.memory_space<vmem>>, vector<8x64xf32>
    %3 = arith.addf %2, %1 : vector<8x64xf32>
    %c8_i32 = arith.constant 8 : i32
    %4 = arith.muli %arg0, %c8_i32 : i32
    %5 = tpu.iota {dimensions = array<i32: 0>} : vector<8x64xi32>
    %6 = vector.broadcast %4 : i32 to vector<8x64xi32>
    %7 = arith.addi %5, %6 : vector<8x64xi32>
    %8 = tpu.iota {dimensions = array<i32: 1>} : vector<8x64xi32>
    %c64_i32 = arith.constant 64 : i32
    %9 = vector.broadcast %c64_i32 : i32 to vector<8x64xi32>
    %10 = arith.muli %7, %9 : vector<8x64xi32>
    %11 = arith.addi %10, %8 : vector<8x64xi32>
    %c0_3 = arith.constant 0 : index
    %12 = memref.load %arg1[%c0_3] : memref<1xi32, #tpu.memory_space<smem>>
    %c-1640531527_i32 = arith.constant -1640531527 : i32
    %13 = arith.muli %12, %c-1640531527_i32 : i32
    %14 = vector.broadcast %13 : i32 to vector<8x64xi32>
    %15 = arith.addi %11, %14 : vector<8x64xi32>
    %c16_i32 = arith.constant 16 : i32
    %16 = vector.broadcast %c16_i32 : i32 to vector<8x64xi32>
    %17 = arith.shrui %15, %16 : vector<8x64xi32>
    %18 = arith.xori %15, %17 : vector<8x64xi32>
    %c2146121005_i32 = arith.constant 2146121005 : i32
    %19 = vector.broadcast %c2146121005_i32 : i32 to vector<8x64xi32>
    %20 = arith.muli %18, %19 : vector<8x64xi32>
    %c15_i32 = arith.constant 15 : i32
    %21 = vector.broadcast %c15_i32 : i32 to vector<8x64xi32>
    %22 = arith.shrui %20, %21 : vector<8x64xi32>
    %23 = arith.xori %20, %22 : vector<8x64xi32>
    %c-2073254261_i32 = arith.constant -2073254261 : i32
    %24 = vector.broadcast %c-2073254261_i32 : i32 to vector<8x64xi32>
    %25 = arith.muli %23, %24 : vector<8x64xi32>
    %c16_i32_4 = arith.constant 16 : i32
    %26 = vector.broadcast %c16_i32_4 : i32 to vector<8x64xi32>
    %27 = arith.shrui %25, %26 : vector<8x64xi32>
    %28 = arith.xori %25, %27 : vector<8x64xi32>
    %c-429496730_i32 = arith.constant -429496730 : i32
    %29 = vector.broadcast %c-429496730_i32 : i32 to vector<8x64xi32>
    %30 = arith.cmpi ult, %28, %29 : vector<8x64xi32>
    %cst = arith.constant 1.11111116 : f32
    %31 = vector.broadcast %cst : f32 to vector<8x64xf32>
    %32 = arith.mulf %3, %31 : vector<8x64xf32>
    %cst_5 = arith.constant 0.000000e+00 : f32
    %33 = vector.broadcast %cst_5 : f32 to vector<8x64xf32>
    %34 = arith.select %30, %32, %33 : vector<8x64xi1>, vector<8x64xf32>
    %c0_6 = arith.constant 0 : index
    %c0_7 = arith.constant 0 : index
    %35 = vector.load %arg4[%c0_6, %c0_7] : memref<8x64xf32, #tpu.memory_space<vmem>>, vector<8x64xf32>
    tpu.vector_store %arg4[%c0_6, %c0_7], %34 {strides = array<i32>} : memref<8x64xf32, #tpu.memory_space<vmem>>, vector<8x64xf32>,
    return
  }
  func.func @transform_0(%arg0: i32, %arg1: memref<1xi32, #tpu.memory_space<smem>>) -> (i32, i32) {
    %c0_i32 = arith.constant 0 : i32
    %c0_i32_0 = arith.constant 0 : i32
    return %arg0, %c0_i32 : i32, i32
  }
  func.func @transform_1(%arg0: i32, %arg1: memref<1xi32, #tpu.memory_space<smem>>) -> (i32, i32) {
    %c0_i32 = arith.constant 0 : i32
    %c0_i32_0 = arith.constant 0 : i32
    return %arg0, %c0_i32 : i32, i32
  }
  func.func @transform_2(%arg0: i32, %arg1: memref<1xi32, #tpu.memory_space<smem>>) -> (i32, i32) {
    %c0_i32 = arith.constant 0 : i32
    %c0_i32_0 = arith.constant 0 : i32
    return %arg0, %c0_i32 : i32, i32
  }
}

</mosaic_0001>

<llo_original>
// kernel: tpu_custom_call.1
$region0: #{tpu_custom_call.1}
  #allocation0 [shape = 'u32[]', space=smem, size = 0x4, offset = 0x4, fixed_abs, tag = 'smem constant byte address 0x4 - core index']
  #allocation1 [shape = 'u32[144,128]{1,0:T(1,128)}', space=vmem, size = 0x12000, scoped, tag = 'internal scratch']
  #allocation2 [shape = 's32[1]{0}', space=sflag, size = 0x4, scoped, tag = 'scoped memory for tpu_custom_call.1']
  #allocation3 [shape = 's32[1]{0:T(128)S(6)}', space=smem, size = 0x200, scoped, tag = 'prefetched SMEM operand 0']
  %s0 = inlined_call_operand.<no memory space> [shape: s32[1], index: 0, kind: input, shape index: {}]
  %s1 = inlined_call_operand.hbm [shape: f32[8,64], index: 1, kind: input, shape index: {}]
  %s2 = inlined_call_operand.hbm [shape: f32[8,32], index: 2, kind: input, shape index: {}]
  %s3 = inlined_call_operand.hbm [shape: f32[8,64], index: 3, kind: output, shape index: {}]
  %s4 = sld [smem:[#allocation0]]
  $region26: #{tpu_custom_call.1} parent=0
    _
  %s6 = ssub.s32 1, %s4
  %s7 = scalar_select 0, %s6, %s4
  %8 = sst [smem:[#allocation3]] %s0
  $region1: #{tpu_custom_call.1} parent=0
    #allocation4 [shape = 'u8[4096]{0}', space=vmem, size = 0x1000, scoped, tag = 'input window, operand 1, single buffered']
    #allocation5 [shape = 's32[1]{0}', space=sflag, size = 0x4, scoped, tag = 'scoped memory for tpu_custom_call.1']
    #allocation6 [shape = 's32[1]{0}', space=sflag, size = 0x4, scoped, tag = 'scoped memory for tpu_custom_call.1']
    #allocation7 [shape = 'u8[4096]{0}', space=vmem, size = 0x1000, scoped, tag = 'input window, operand 2, single buffered']
    #allocation8 [shape = 's32[1]{0}', space=sflag, size = 0x4, scoped, tag = 'scoped memory for tpu_custom_call.1']
    #allocation9 [shape = 'u8[4096]{0}', space=vmem, size = 0x1000, scoped, tag = 'output window, operand 0, single buffered']
    %9 = vsyncpa [#allocation5], 0
    %10 = vsyncpa [#allocation8], 0
    %11 = vsyncpa [#allocation6], 0
    // Predicated region
    $region2: #{tpu_custom_call.1} parent=1 // pred_check
      _
    $region3: #{tpu_custom_call.1} parent=1 // pred_check_branch
      %13 = sbr.rel (0) target = $region5
    $region4: #{tpu_custom_call.1} parent=1 // pred_region
      %s15 = ssub.s32 128, 128
      %16 = vsyncadd [#allocation5], %s15
      %s18 = sshll.u32 [#allocation4], 4
      %s19 = int_to_ptr.vmem [resolvable:$true] %s18
      %21 = dma.hbm_to_vmem [thread:$0]  %s1, 128, %s19, [#allocation5]
    $region5: #{tpu_custom_call.1} parent=1 // pred_fallthru
      _
    // Predicated region
    $region6: #{tpu_custom_call.1} parent=1 // pred_check
      _
    $region7: #{tpu_custom_call.1} parent=1 // pred_check_branch
      %23 = sbr.rel (0) target = $region9
    $region8: #{tpu_custom_call.1} parent=1 // pred_region
      %s25 = ssub.s32 128, 128
      %26 = vsyncadd [#allocation8], %s25
      %s28 = sshll.u32 [#allocation7], 4
      %s29 = int_to_ptr.vmem [resolvable:$true] %s28
      %31 = dma.hbm_to_vmem [thread:$0]  %s2, 128, %s29, [#allocation8]
    $region9: #{tpu_custom_call.1} parent=1 // pred_fallthru
      _
    // Predicated region
    $region10: #{tpu_custom_call.1} parent=1 // pred_check
      _
    $region11: #{tpu_custom_call.1} parent=1 // pred_check_branch
      %33 = sbr.rel (0) target = $region13
    $region12: #{tpu_custom_call.1} parent=1 // pred_region
      %34 = dma.done [#allocation5], 128
    $region13: #{tpu_custom_call.1} parent=1 // pred_fallthru
      _
    // Predicated region
    $region14: #{tpu_custom_call.1} parent=1 // pred_check
      _
    $region15: #{tpu_custom_call.1} parent=1 // pred_check_branch
      %36 = sbr.rel (0) target = $region17
    $region16: #{tpu_custom_call.1} parent=1 // pred_region
      %37 = dma.done [#allocation8], 128
    $region17: #{tpu_custom_call.1} parent=1 // pred_fallthru
      _
    %v38 = vld [vmem:[#allocation7] sm:$0xff]
    %40 = vrot.lane.b32.xlu0 %v38, 32
    %v41 = vpop.permute.xlu0 %40
    %vm43 = vcmask 261120
    %v44 = vsel %vm43, %v38, %v41
    %v45 = vld [vmem:[#allocation4] sm:$0xff]
    %v46 = vadd.f32 %v45, %v44
    %s47 = smul.u32 0, 8
    %v48 = vlaneseq
    %v49 = vshrl.u32 %v48, 7
    %v50 = vstv %s47
    %v51 = vadd.s32 %v49, %v50
    %v52 = vlaneseq
    %v53 = vand.u32 %v52, 127
    %v54 = vmul.u32 %v51, 64
    %v55 = vadd.s32 %v54, %v53
    %s56 = sld [smem:[#allocation3]]
    %s57 = smul.u32 %s56, 2654435769
    %v58 = vstv %s57
    %v59 = vadd.s32 %v55, %v58
    %v60 = vshrl.u32 %v59, 16
    %v61 = vxor.u32 %v59, %v60
    %v62 = vmul.u32 %v61, 2146121005
    %v63 = vshrl.u32 %v62, 15
    %v64 = vxor.u32 %v62, %v63
    %v65 = vmul.u32 %v64, 2221713035
    %v66 = vshrl.u32 %v65, 16
    %v67 = vxor.u32 %v65, %v66
    %vm68 = vcmp.lt.u32.totalorder %v67, 3865470566
    %v69 = vmul.f32 %v46, 1.1111112
    %v70 = vsel %vm68, %v69, 0.0
    %vm71 = vcmask 523264
    %72 = vst.msk [vmem:[#allocation9] sm:$0xff] %vm71, %v70
    // Predicated region
    $region18: #{tpu_custom_call.1} parent=1 // pred_check
      _
    $region19: #{tpu_custom_call.1} parent=1 // pred_check_branch
      %74 = sbr.rel (0) target = $region21
    $region20: #{tpu_custom_call.1} parent=1 // pred_region
      %s76 = ssub.s32 128, 128
      %77 = vsyncadd [#allocation6], %s76
      %s79 = sshll.u32 [#allocation9], 4
      %s80 = int_to_ptr.vmem [resolvable:$true] %s79
      %82 = dma.vmem_to_hbm [thread:$0]  %s80, 128, %s3, [#allocation6]
    $region21: #{tpu_custom_call.1} parent=1 // pred_fallthru
      _
    // Predicated region
    $region22: #{tpu_custom_call.1} parent=1 // pred_check
      _
    $region23: #{tpu_custom_call.1} parent=1 // pred_check_branch
      %84 = sbr.rel (0) target = $region25
    $region24: #{tpu_custom_call.1} parent=1 // pred_region
      %85 = dma.done [#allocation6], 128
    $region25: #{tpu_custom_call.1} parent=1 // pred_fallthru
      _
    %86 = vsyncpa [#allocation5], 1
    %87 = vsyncpa [#allocation8], 1
    %88 = vsyncpa [#allocation6], 1

</llo_original>
